<compile_context>
chip_gen: v5e
topology: v5e:2x2
jax: 0.10.0
libtpu: 0.0.40
codegen_flags: <defaults>
</compile_context>

<pallas_src>
import jax
import jax.numpy as jnp
from jax.experimental import pallas as pl
from jax.experimental.pallas import tpu as pltpu

EPS = 1e-5


def prenorm_kernel(x_ref, gamma_ref, beta_ref, w_ref, b_ref, o_ref):
    # x_ref: (TM, D) token tile; gamma/beta/b: (1, D); w: (D, D)
    x = x_ref[...].astype(jnp.float32)
    d = x.shape[-1]
    inv_d = jnp.float32(1.0 / d)

    # Single-pass LayerNorm stats: var = E[x^2] - mean^2 (f32 throughout).
    s = jnp.sum(x, axis=-1, keepdims=True)
    s2 = jnp.sum(x * x, axis=-1, keepdims=True)
    mean = s * inv_d
    var = jnp.maximum(s2 * inv_d - mean * mean, 0.0)
    xn = (x - mean) * jax.lax.rsqrt(var + EPS)
    y = xn * gamma_ref[...].astype(jnp.float32) + beta_ref[...].astype(jnp.float32)

    # fn = Linear(D, D): feed the MXU in W's native dtype (no per-step f32
    # up-cast of W), accumulate in f32.
    out = jnp.dot(y.astype(w_ref.dtype), w_ref[...],
                  preferred_element_type=jnp.float32)
    out = out + b_ref[...].astype(jnp.float32)
    o_ref[...] = out.astype(o_ref.dtype)


def _choose_tm(tokens, d, itemsize, budget_bytes=24 * 1024 * 1024):
    """Largest power-of-two row tile (<=1024) such that double-buffered in/out
    tiles + a single-buffered W + f32 compute copies stay under budget_bytes.
    24 MiB leaves ample headroom under v7x's 64 MiB physical VMEM."""
    w_bytes = d * d * itemsize
    avail = max(budget_bytes - w_bytes, 1 << 20)
    # 2 input + 2 output pipeline buffers of (tm, d) + ~2 f32 compute copies.
    per_row = (4 * itemsize + 8) * d
    tm = 1024
    while tm > 8 and tm * per_row > avail:
        tm //= 2
    # Keep at least 2 grid steps so the parallel token axis can use both v7x TCs.
    while tm > 8 and pl.cdiv(tokens, tm) < 2:
        tm //= 2
    return max(tm, 8)


def prenorm_linear(x, gamma, beta, w, b, *, tm=None):
    """x: (B, N, D). Returns fn(LayerNorm(x)) with fn = x @ w + b."""
    B, N, D = x.shape
    tokens = B * N
    itemsize = jnp.dtype(x.dtype).itemsize
    if tm is None:
        tm = _choose_tm(tokens, D, itemsize)

    x2 = x.reshape(tokens, D)
    padded = pl.cdiv(tokens, tm) * tm
    if padded != tokens:
        x2 = jnp.pad(x2, ((0, padded - tokens), (0, 0)))
    gamma2 = gamma.reshape(1, D)
    beta2 = beta.reshape(1, D)
    b2 = b.reshape(1, D)

    w_bytes = D * D * jnp.dtype(w.dtype).itemsize
    footprint = (4 * tm * D * itemsize          # double-buffered in/out tiles
                 + 2 * w_bytes                  # W (worst case: still 2 buffers)
                 + 8 * D * itemsize             # gamma/beta/bias buffers
                 + 8 * tm * D)                  # f32 compute copies
    vmem_limit = int(min(max(2 * footprint, 32 * 1024 * 1024), 56 * 1024 * 1024))

    cost = pl.CostEstimate(
        flops=2 * padded * D * D,
        transcendentals=padded,                 # one rsqrt per token row
        bytes_accessed=(2 * padded * D + 3 * D) * itemsize + w_bytes,
    )

    def build(single_buffer_consts):
        const_kw = dict(pipeline_mode=pl.Buffered(1)) if single_buffer_consts else {}
        in_specs = [
            pl.BlockSpec((tm, D), lambda i: (i, 0)),             # x tile (pipelined)
            pl.BlockSpec((1, D), lambda i: (0, 0), **const_kw),  # gamma (grid-invariant)
            pl.BlockSpec((1, D), lambda i: (0, 0), **const_kw),  # beta
            pl.BlockSpec((D, D), lambda i: (0, 0), **const_kw),  # W
            pl.BlockSpec((1, D), lambda i: (0, 0), **const_kw),  # bias
        ]
        return pl.pallas_call(
            prenorm_kernel,
            out_shape=jax.ShapeDtypeStruct((padded, D), x.dtype),
            grid_spec=pltpu.PrefetchScalarGridSpec(
                num_scalar_prefetch=0,
                grid=(padded // tm,),
                in_specs=in_specs,
                out_specs=pl.BlockSpec((tm, D), lambda i: (i, 0)),
            ),
            compiler_params=pltpu.CompilerParams(
                dimension_semantics=("parallel",),
                vmem_limit_bytes=vmem_limit,
            ),
            cost_estimate=cost,
        )

    try:
        out = build(True)(x2, gamma2, beta2, w, b2)
        out = jax.block_until_ready(out)
    except Exception:
        # Fallback for JAX versions where pipeline_mode on BlockSpec is unsupported.
        out = build(False)(x2, gamma2, beta2, w, b2)

    return out[:tokens].reshape(B, N, D)


def prenorm_ref(x, gamma, beta, w, b):
    xf = x.astype(jnp.float32)
    mean = jnp.mean(xf, axis=-1, keepdims=True)
    var = jnp.mean((xf - mean) ** 2, axis=-1, keepdims=True)
    xn = (xf - mean) * jax.lax.rsqrt(var + EPS)
    y = xn * gamma + beta
    return (y @ w.astype(jnp.float32) + b).astype(x.dtype)


if __name__ == "__main__":
    # TODO(synk): `fn` in PreNorm is an arbitrary module; a token-wise Linear(D, D)
    # is fused here as the representative hot path (attention/MLP internals would
    # follow the normalized activations).
    B, N, D = 2, 8, 32
    key = jax.random.PRNGKey(0)
    kx, kg, kb, kw, kbi = jax.random.split(key, 5)

    x = jax.random.normal(kx, (B, N, D), dtype=jnp.float32)
    gamma = 1.0 + 0.01 * jax.random.normal(kg, (D,), dtype=jnp.float32)
    beta = 0.01 * jax.random.normal(kb, (D,), dtype=jnp.float32)
    w = jax.random.normal(kw, (D, D), dtype=jnp.float32) / jnp.sqrt(D)
    b = 0.01 * jax.random.normal(kbi, (D,), dtype=jnp.float32)

    out = prenorm_linear(x, gamma, beta, w, b)
    out = jax.block_until_ready(out)

    ref = prenorm_ref(x, gamma, beta, w, b)
    assert out.shape == (B, N, D)
    assert jnp.allclose(out, ref, atol=1e-4, rtol=1e-4)

    print("KERNEL_OK")
</pallas_src>

<mosaic_0001>
module attributes {stable_mosaic.version = 11 : i64} {
  func.func @prenorm_kernel(%arg0: i32, %arg1: memref<8x32xf32, #tpu.memory_space<vmem>>, %arg2: memref<1x32xf32, #tpu.memory_space<vmem>>, %arg3: memref<1x32xf32, #tpu.memory_space<vmem>>, %arg4: memref<32x32xf32, #tpu.memory_space<vmem>>, %arg5: memref<1x32xf32, #tpu.memory_space<vmem>>, %arg6: memref<8x32xf32, #tpu.memory_space<vmem>>) attributes {dimension_semantics = [#tpu.dimension_semantics<parallel>], iteration_bounds = array<i64: 2>, scalar_prefetch = 0 : i64, scratch_operands = 0 : i64, tpu.core_type = #tpu.core_type<tc>, window_params = [{transform_indices = @transform_0, window_bounds = array<i64: 8, 32>}, {pipeline_mode = #tpu.pipeline_mode<synchronous>, transform_indices = @transform_1, window_bounds = array<i64: 1, 32>}, {pipeline_mode = #tpu.pipeline_mode<synchronous>, transform_indices = @transform_2, window_bounds = array<i64: 1, 32>}, {pipeline_mode = #tpu.pipeline_mode<synchronous>, transform_indices = @transform_3, window_bounds = array<i64: 32, 32>}, {pipeline_mode = #tpu.pipeline_mode<synchronous>, transform_indices = @transform_4, window_bounds = array<i64: 1, 32>}, {transform_indices = @transform_5, window_bounds = array<i64: 8, 32>}]} {
    %c0 = arith.constant 0 : index
    %c0_0 = arith.constant 0 : index
    %0 = vector.load %arg1[%c0, %c0_0] : memref<8x32xf32, #tpu.memory_space<vmem>>, vector<8x32xf32>
    %cst = arith.constant dense<0.000000e+00> : vector<8xf32>
    %1 = vector.multi_reduction <add>, %0, %cst [1] : vector<8x32xf32> to vector<8xf32>
    %2 = vector.shape_cast %1 : vector<8xf32> to vector<8x1xf32>
    %3 = arith.mulf %0, %0 : vector<8x32xf32>
    %cst_1 = arith.constant dense<0.000000e+00> : vector<8xf32>
    %4 = vector.multi_reduction <add>, %3, %cst_1 [1] : vector<8x32xf32> to vector<8xf32>
    %5 = vector.shape_cast %4 : vector<8xf32> to vector<8x1xf32>
    %cst_2 = arith.constant 3.125000e-02 : f32
    %6 = vector.broadcast %cst_2 : f32 to vector<8x1xf32>
    %7 = arith.mulf %2, %6 : vector<8x1xf32>
    %cst_3 = arith.constant 3.125000e-02 : f32
    %8 = vector.broadcast %cst_3 : f32 to vector<8x1xf32>
    %9 = arith.mulf %5, %8 : vector<8x1xf32>
    %10 = arith.mulf %7, %7 : vector<8x1xf32>
    %11 = arith.subf %9, %10 : vector<8x1xf32>
    %cst_4 = arith.constant 0.000000e+00 : f32
    %12 = vector.broadcast %cst_4 : f32 to vector<8x1xf32>
    %13 = arith.maximumf %11, %12 : vector<8x1xf32>
    %14 = vector.broadcast %7 : vector<8x1xf32> to vector<8x32xf32>
    %15 = arith.subf %0, %14 : vector<8x32xf32>
    %cst_5 = arith.constant 9.99999974E-6 : f32
    %16 = vector.broadcast %cst_5 : f32 to vector<8x1xf32>
    %17 = arith.addf %13, %16 : vector<8x1xf32>
    %18 = math.rsqrt %17 : vector<8x1xf32>
    %19 = vector.broadcast %18 : vector<8x1xf32> to vector<8x32xf32>
    %20 = arith.mulf %15, %19 : vector<8x32xf32>
    %c0_6 = arith.constant 0 : index
    %c0_7 = arith.constant 0 : index
    %21 = vector.load %arg2[%c0_6, %c0_7] : memref<1x32xf32, #tpu.memory_space<vmem>>, vector<1x32xf32>
    %22 = vector.broadcast %21 : vector<1x32xf32> to vector<8x32xf32>
    %23 = arith.mulf %20, %22 : vector<8x32xf32>
    %c0_8 = arith.constant 0 : index
    %c0_9 = arith.constant 0 : index
    %24 = vector.load %arg3[%c0_8, %c0_9] : memref<1x32xf32, #tpu.memory_space<vmem>>, vector<1x32xf32>
    %25 = vector.broadcast %24 : vector<1x32xf32> to vector<8x32xf32>
    %26 = arith.addf %23, %25 : vector<8x32xf32>
    %c0_10 = arith.constant 0 : index
    %c0_11 = arith.constant 0 : index
    %27 = vector.load %arg4[%c0_10, %c0_11] : memref<32x32xf32, #tpu.memory_space<vmem>>, vector<32x32xf32>
    %cst_12 = arith.constant dense<0.000000e+00> : vector<8x32xf32>
    %28 = tpu.matmul %26, %27, %cst_12 {dimension_numbers = #tpu.dot_dimension_numbers<[1], [0], [0], [1], [0, 0, 1, 1], [], []>} : vector<8x32xf32>, vector<32x32xf32>, vector<8x32xf32> -> vector<8x32xf32>
    %c0_13 = arith.constant 0 : index
    %c0_14 = arith.constant 0 : index
    %29 = vector.load %arg5[%c0_13, %c0_14] : memref<1x32xf32, #tpu.memory_space<vmem>>, vector<1x32xf32>
    %30 = vector.broadcast %29 : vector<1x32xf32> to vector<8x32xf32>
    %31 = arith.addf %28, %30 : vector<8x32xf32>
    %c0_15 = arith.constant 0 : index
    %c0_16 = arith.constant 0 : index
    %32 = vector.load %arg6[%c0_15, %c0_16] : memref<8x32xf32, #tpu.memory_space<vmem>>, vector<8x32xf32>
    tpu.vector_store %arg6[%c0_15, %c0_16], %31 {strides = array<i32>} : memref<8x32xf32, #tpu.memory_space<vmem>>, vector<8x32xf32>,
    return
  }
  func.func @transform_0(%arg0: i32) -> (i32, i32) {
    %c0_i32 = arith.constant 0 : i32
    %c0_i32_0 = arith.constant 0 : i32
    return %arg0, %c0_i32 : i32, i32
  }
  func.func @transform_1(%arg0: i32) -> (i32, i32) {
    %c0_i32 = arith.constant 0 : i32
    %c0_i32_0 = arith.constant 0 : i32
    %c0_i32_1 = arith.constant 0 : i32
    return %c0_i32, %c0_i32_0 : i32, i32
  }
  func.func @transform_2(%arg0: i32) -> (i32, i32) {
    %c0_i32 = arith.constant 0 : i32
    %c0_i32_0 = arith.constant 0 : i32
    %c0_i32_1 = arith.constant 0 : i32
    return %c0_i32, %c0_i32_0 : i32, i32
  }
  func.func @transform_3(%arg0: i32) -> (i32, i32) {
    %c0_i32 = arith.constant 0 : i32
    %c0_i32_0 = arith.constant 0 : i32
    %c0_i32_1 = arith.constant 0 : i32
    return %c0_i32, %c0_i32_0 : i32, i32
  }
  func.func @transform_4(%arg0: i32) -> (i32, i32) {
    %c0_i32 = arith.constant 0 : i32
    %c0_i32_0 = arith.constant 0 : i32
    %c0_i32_1 = arith.constant 0 : i32
    return %c0_i32, %c0_i32_0 : i32, i32
  }
  func.func @transform_5(%arg0: i32) -> (i32, i32) {
    %c0_i32 = arith.constant 0 : i32
    %c0_i32_0 = arith.constant 0 : i32
    return %arg0, %c0_i32 : i32, i32
  }
}

module attributes {stable_mosaic.version = 11 : i64} {
  func.func @prenorm_kernel(%arg0: i32, %arg1: memref<8x32xf32, #tpu.memory_space<vmem>>, %arg2: memref<1x32xf32, #tpu.memory_space<vmem>>, %arg3: memref<1x32xf32, #tpu.memory_space<vmem>>, %arg4: memref<32x32xf32, #tpu.memory_space<vmem>>, %arg5: memref<1x32xf32, #tpu.memory_space<vmem>>, %arg6: memref<8x32xf32, #tpu.memory_space<vmem>>) attributes {dimension_semantics = [#tpu.dimension_semantics<parallel>], iteration_bounds = array<i64: 2>, scalar_prefetch = 0 : i64, scratch_operands = 0 : i64, tpu.core_type = #tpu.core_type<tc>, window_params = [{transform_indices = @transform_0, window_bounds = array<i64: 8, 32>}, {pipeline_mode = #tpu.pipeline_mode<synchronous>, transform_indices = @transform_1, window_bounds = array<i64: 1, 32>}, {pipeline_mode = #tpu.pipeline_mode<synchronous>, transform_indices = @transform_2, window_bounds = array<i64: 1, 32>}, {pipeline_mode = #tpu.pipeline_mode<synchronous>, transform_indices = @transform_3, window_bounds = array<i64: 32, 32>}, {pipeline_mode = #tpu.pipeline_mode<synchronous>, transform_indices = @transform_4, window_bounds = array<i64: 1, 32>}, {transform_indices = @transform_5, window_bounds = array<i64: 8, 32>}]} {
    %c0 = arith.constant 0 : index
    %c0_0 = arith.constant 0 : index
    %0 = vector.load %arg1[%c0, %c0_0] : memref<8x32xf32, #tpu.memory_space<vmem>>, vector<8x32xf32>
    %cst = arith.constant dense<0.000000e+00> : vector<8xf32>
    %1 = vector.multi_reduction <add>, %0, %cst [1] : vector<8x32xf32> to vector<8xf32>
    %2 = vector.shape_cast %1 : vector<8xf32> to vector<8x1xf32>
    %3 = arith.mulf %0, %0 : vector<8x32xf32>
    %cst_1 = arith.constant dense<0.000000e+00> : vector<8xf32>
    %4 = vector.multi_reduction <add>, %3, %cst_1 [1] : vector<8x32xf32> to vector<8xf32>
    %5 = vector.shape_cast %4 : vector<8xf32> to vector<8x1xf32>
    %cst_2 = arith.constant 3.125000e-02 : f32
    %6 = vector.broadcast %cst_2 : f32 to vector<8x1xf32>
    %7 = arith.mulf %2, %6 : vector<8x1xf32>
    %cst_3 = arith.constant 3.125000e-02 : f32
    %8 = vector.broadcast %cst_3 : f32 to vector<8x1xf32>
    %9 = arith.mulf %5, %8 : vector<8x1xf32>
    %10 = arith.mulf %7, %7 : vector<8x1xf32>
    %11 = arith.subf %9, %10 : vector<8x1xf32>
    %cst_4 = arith.constant 0.000000e+00 : f32
    %12 = vector.broadcast %cst_4 : f32 to vector<8x1xf32>
    %13 = arith.maximumf %11, %12 : vector<8x1xf32>
    %14 = vector.broadcast %7 : vector<8x1xf32> to vector<8x32xf32>
    %15 = arith.subf %0, %14 : vector<8x32xf32>
    %cst_5 = arith.constant 9.99999974E-6 : f32
    %16 = vector.broadcast %cst_5 : f32 to vector<8x1xf32>
    %17 = arith.addf %13, %16 : vector<8x1xf32>
    %18 = math.rsqrt %17 : vector<8x1xf32>
    %19 = vector.broadcast %18 : vector<8x1xf32> to vector<8x32xf32>
    %20 = arith.mulf %15, %19 : vector<8x32xf32>
    %c0_6 = arith.constant 0 : index
    %c0_7 = arith.constant 0 : index
    %21 = vector.load %arg2[%c0_6, %c0_7] : memref<1x32xf32, #tpu.memory_space<vmem>>, vector<1x32xf32>
    %22 = vector.broadcast %21 : vector<1x32xf32> to vector<8x32xf32>
    %23 = arith.mulf %20, %22 : vector<8x32xf32>
    %c0_8 = arith.constant 0 : index
    %c0_9 = arith.constant 0 : index
    %24 = vector.load %arg3[%c0_8, %c0_9] : memref<1x32xf32, #tpu.memory_space<vmem>>, vector<1x32xf32>
    %25 = vector.broadcast %24 : vector<1x32xf32> to vector<8x32xf32>
    %26 = arith.addf %23, %25 : vector<8x32xf32>
    %c0_10 = arith.constant 0 : index
    %c0_11 = arith.constant 0 : index
    %27 = vector.load %arg4[%c0_10, %c0_11] : memref<32x32xf32, #tpu.memory_space<vmem>>, vector<32x32xf32>
    %cst_12 = arith.constant dense<0.000000e+00> : vector<8x32xf32>
    %28 = tpu.matmul %26, %27, %cst_12 {dimension_numbers = #tpu.dot_dimension_numbers<[1], [0], [0], [1], [0, 0, 1, 1], [], []>} : vector<8x32xf32>, vector<32x32xf32>, vector<8x32xf32> -> vector<8x32xf32>
    %c0_13 = arith.constant 0 : index
    %c0_14 = arith.constant 0 : index
    %29 = vector.load %arg5[%c0_13, %c0_14] : memref<1x32xf32, #tpu.memory_space<vmem>>, vector<1x32xf32>
    %30 = vector.broadcast %29 : vector<1x32xf32> to vector<8x32xf32>
    %31 = arith.addf %28, %30 : vector<8x32xf32>
    %c0_15 = arith.constant 0 : index
    %c0_16 = arith.constant 0 : index
    %32 = vector.load %arg6[%c0_15, %c0_16] : memref<8x32xf32, #tpu.memory_space<vmem>>, vector<8x32xf32>
    tpu.vector_store %arg6[%c0_15, %c0_16], %31 {strides = array<i32>} : memref<8x32xf32, #tpu.memory_space<vmem>>, vector<8x32xf32>,
    return
  }
  func.func @transform_0(%arg0: i32) -> (i32, i32) {
    %c0_i32 = arith.constant 0 : i32
    %c0_i32_0 = arith.constant 0 : i32
    return %arg0, %c0_i32 : i32, i32
  }
  func.func @transform_1(%arg0: i32) -> (i32, i32) {
    %c0_i32 = arith.constant 0 : i32
    %c0_i32_0 = arith.constant 0 : i32
    %c0_i32_1 = arith.constant 0 : i32
    return %c0_i32, %c0_i32_0 : i32, i32
  }
  func.func @transform_2(%arg0: i32) -> (i32, i32) {
    %c0_i32 = arith.constant 0 : i32
    %c0_i32_0 = arith.constant 0 : i32
    %c0_i32_1 = arith.constant 0 : i32
    return %c0_i32, %c0_i32_0 : i32, i32
  }
  func.func @transform_3(%arg0: i32) -> (i32, i32) {
    %c0_i32 = arith.constant 0 : i32
    %c0_i32_0 = arith.constant 0 : i32
    %c0_i32_1 = arith.constant 0 : i32
    return %c0_i32, %c0_i32_0 : i32, i32
  }
  func.func @transform_4(%arg0: i32) -> (i32, i32) {
    %c0_i32 = arith.constant 0 : i32
    %c0_i32_0 = arith.constant 0 : i32
    %c0_i32_1 = arith.constant 0 : i32
    return %c0_i32, %c0_i32_0 : i32, i32
  }
  func.func @transform_5(%arg0: i32) -> (i32, i32) {
    %c0_i32 = arith.constant 0 : i32
    %c0_i32_0 = arith.constant 0 : i32
    return %arg0, %c0_i32 : i32, i32
  }
}

</mosaic_0001>

<llo_original>
// kernel: tpu_custom_call.1
$region0: #{tpu_custom_call.1}
  #allocation0 [shape = 'u32[]', space=smem, size = 0x4, offset = 0x4, fixed_abs, tag = 'smem constant byte address 0x4 - core index']
  #allocation1 [shape = 'u32[72,128]{1,0:T(1,128)}', space=vmem, size = 0x9000, scoped, tag = 'internal scratch']
  %s0 = inlined_call_operand.hbm [shape: f32[16,32], index: 0, kind: input, shape index: {}]
  %s1 = inlined_call_operand.hbm [shape: f32[1,32], index: 1, kind: input, shape index: {}]
  %s2 = inlined_call_operand.vmem [shape: f32[1,32], index: 2, kind: input, shape index: {}]
  %s3 = inlined_call_operand.hbm [shape: f32[32,32], index: 3, kind: input, shape index: {}]
  %s4 = inlined_call_operand.vmem [shape: f32[1,32], index: 4, kind: input, shape index: {}]
  %s5 = inlined_call_operand.hbm [shape: f32[16,32], index: 5, kind: output, shape index: {}]
  %s6 = sld [smem:[#allocation0]]
  $region65: #{tpu_custom_call.1} parent=0
    _
  %s8 = ssub.s32 1, %s6
  %s9 = scalar_select 0, %s8, %s6
  $region1: #{tpu_custom_call.1} parent=0
    #allocation2 [shape = 'u8[8192]{0}', space=vmem, size = 0x2000, scoped, tag = 'input window, operand 0']
    #allocation3 [shape = 's32[2]{0}', space=sflag, size = 0x8, scoped, tag = 'scoped memory for tpu_custom_call.1']
    #allocation4 [shape = 's32[2]{0}', space=sflag, size = 0x8, scoped, tag = 'scoped memory for tpu_custom_call.1']
    #allocation5 [shape = 'u8[512]{0}', space=vmem, size = 0x400, scoped, tag = 'input window, operand 1, single buffered']
    #allocation6 [shape = 's32[1]{0}', space=sflag, size = 0x4, scoped, tag = 'scoped memory for tpu_custom_call.1']
    #allocation7 [shape = 'u8[16384]{0}', space=vmem, size = 0x4000, scoped, tag = 'input window, operand 3, single buffered']
    #allocation8 [shape = 'u8[8192]{0}', space=vmem, size = 0x2000, scoped, tag = 'output window, operand 0']
    %10 = vsyncpa [#allocation3], 0
    %s11 = scalar_lea.sflag [#allocation3], 1
    %12 = vsyncpa %s11, 0
    %13 = vsyncpa [#allocation6], 0
    %14 = vsyncpa [#allocation4], 0
    %s15 = scalar_lea.sflag [#allocation4], 1
    %16 = vsyncpa %s15, 0
    loop: start=0, step=1, limit=4
    $region2: #{tpu_custom_call.1} parent=1 // loop_pre_header
      _
    $region3: #{tpu_custom_call.1} parent=1 // loop_header
      %s18 = sphi 0, %s22
      %p19 = scmp.ge.s32.totalorder %s18, 4
      %s28 = sphi 0, %s30
      %s31 = sphi 0, %s28
      %s32 = sphi 0, %s31
      %s48 = sphi 0, %s32
      %s52 = sphi 0, %s52
      %s54 = sphi 0, %s52
      %s55 = sphi 0, %s54
      %s69 = sphi 0, %s55
      %s73 = sphi 0, %s73
      %s75 = sphi 0, %s73
      %s76 = sphi 0, %s75
      %s90 = sphi 0, %s76
      %s94 = sphi 0, %s94
      %s96 = sphi 0, %s94
      %s97 = sphi 0, %s96
      %s111 = sphi 0, %s97
      %s115 = sphi 0, %s115
      %s117 = sphi 0, %s115
      %s118 = sphi 0, %s117
      %s132 = sphi 0, %s118
      %s138 = sphi 0, %s140
      %s141 = sphi 0, %s138
      %s142 = sphi 0, %s141
      %s158 = sphi 0, %s142
    $region4: #{tpu_custom_call.1} parent=1 // loop_header_branch
      %21 = sbr.rel (%p19) target = $region8
    $region5: #{tpu_custom_call.1} parent=1 // loop_body
      %s23 = ssub.s32 %s18, 1
      %s24 = ssub.s32 %s18, 2
      %s25 = sadd.s32 %s18, 1
      %s26 = ssub.s32 %s18, %s25
      %p27 = scmp.eq.s32.totalorder %s26, 0
      %s29 = sadd.s32 %s28, 1
      %s30 = scalar_select %p27, %s28, %s29
      %p33 = pneg %p27
      %p34 = scmp.eq.s32.totalorder %s18, 1
      %p35 = por %p33, %p34
      %p36 = scmp.ne.s32.totalorder %s28, %s31
      %p37 = scmp.eq.s32.totalorder %s18, 0
      %p38 = por %p36, %p37
      %p39 = scmp.ne.s32.totalorder %s28, %s31
      %p40 = scmp.eq.s32.totalorder %s23, 1
      %p41 = por %p39, %p40
      %p42 = scmp.ne.s32.totalorder %s31, %s32
      %p43 = scmp.eq.s32.totalorder %s23, 0
      %p44 = por %p42, %p43
      %p45 = scmp.ne.s32.totalorder %s31, %s32
      %p46 = scmp.eq.s32.totalorder %s24, 1
      %p47 = por %p45, %p46
      %p49 = scmp.ne.s32.totalorder %s32, %s48
      %p50 = scmp.eq.s32.totalorder %s24, 0
      %p51 = por %p49, %p50
      %s53 = sadd.s32 %s52, 1
      %p56 = scmp.eq.s32.totalorder %s18, 1
      %p57 = scmp.ne.s32.totalorder %s52, %s54
      %p58 = scmp.eq.s32.totalorder %s18, 0
      %p59 = por %p57, %p58
      %p60 = scmp.ne.s32.totalorder %s52, %s54
      %p61 = scmp.eq.s32.totalorder %s23, 1
      %p62 = por %p60, %p61
      %p63 = scmp.ne.s32.totalorder %s54, %s55
      %p64 = scmp.eq.s32.totalorder %s23, 0
      %p65 = por %p63, %p64
      %p66 = scmp.ne.s32.totalorder %s54, %s55
      %p67 = scmp.eq.s32.totalorder %s24, 1
      %p68 = por %p66, %p67
      %p70 = scmp.ne.s32.totalorder %s55, %s69
      %p71 = scmp.eq.s32.totalorder %s24, 0
      %p72 = por %p70, %p71
      %s74 = sadd.s32 %s73, 1
      %p77 = scmp.eq.s32.totalorder %s18, 1
      %p78 = scmp.ne.s32.totalorder %s73, %s75
      %p79 = scmp.eq.s32.totalorder %s18, 0
      %p80 = por %p78, %p79
      %p81 = scmp.ne.s32.totalorder %s73, %s75
      %p82 = scmp.eq.s32.totalorder %s23, 1
      %p83 = por %p81, %p82
      %p84 = scmp.ne.s32.totalorder %s75, %s76
      %p85 = scmp.eq.s32.totalorder %s23, 0
      %p86 = por %p84, %p85
      %p87 = scmp.ne.s32.totalorder %s75, %s76
      %p88 = scmp.eq.s32.totalorder %s24, 1
      %p89 = por %p87, %p88
      %p91 = scmp.ne.s32.totalorder %s76, %s90
      %p92 = scmp.eq.s32.totalorder %s24, 0
      %p93 = por %p91, %p92
      %s95 = sadd.s32 %s94, 1
      %p98 = scmp.eq.s32.totalorder %s18, 1
      %p99 = scmp.ne.s32.totalorder %s94, %s96
      %p100 = scmp.eq.s32.totalorder %s18, 0
      %p101 = por %p99, %p100
      %p102 = scmp.ne.s32.totalorder %s94, %s96
      %p103 = scmp.eq.s32.totalorder %s23, 1
      %p104 = por %p102, %p103
      %p105 = scmp.ne.s32.totalorder %s96, %s97
      %p106 = scmp.eq.s32.totalorder %s23, 0
      %p107 = por %p105, %p106
      %p108 = scmp.ne.s32.totalorder %s96, %s97
      %p109 = scmp.eq.s32.totalorder %s24, 1
      %p110 = por %p108, %p109
      %p112 = scmp.ne.s32.totalorder %s97, %s111
      %p113 = scmp.eq.s32.totalorder %s24, 0
      %p114 = por %p112, %p113
      %s116 = sadd.s32 %s115, 1
      %p119 = scmp.eq.s32.totalorder %s18, 1
      %p120 = scmp.ne.s32.totalorder %s115, %s117
      %p121 = scmp.eq.s32.totalorder %s18, 0
      %p122 = por %p120, %p121
      %p123 = scmp.ne.s32.totalorder %s115, %s117
      %p124 = scmp.eq.s32.totalorder %s23, 1
      %p125 = por %p123, %p124
      %p126 = scmp.ne.s32.totalorder %s117, %s118
      %p127 = scmp.eq.s32.totalorder %s23, 0
      %p128 = por %p126, %p127
      %p129 = scmp.ne.s32.totalorder %s117, %s118
      %p130 = scmp.eq.s32.totalorder %s24, 1
      %p131 = por %p129, %p130
      %p133 = scmp.ne.s32.totalorder %s118, %s132
      %p134 = scmp.eq.s32.totalorder %s24, 0
      %p135 = por %p133, %p134
      %s136 = ssub.s32 %s18, %s25
      %p137 = scmp.eq.s32.totalorder %s136, 0
      %s139 = sadd.s32 %s138, 1
      %s140 = scalar_select %p137, %s138, %s139
      %p143 = pneg %p137
      %p144 = scmp.eq.s32.totalorder %s18, 1
      %p145 = por %p143, %p144
      %p146 = scmp.ne.s32.totalorder %s138, %s141
      %p147 = scmp.eq.s32.totalorder %s18, 0
      %p148 = por %p146, %p147
      %p149 = scmp.ne.s32.totalorder %s138, %s141
      %p150 = scmp.eq.s32.totalorder %s23, 1
      %p151 = por %p149, %p150
      %p152 = scmp.ne.s32.totalorder %s141, %s142
      %p153 = scmp.eq.s32.totalorder %s23, 0
      %p154 = por %p152, %p153
      %p155 = scmp.ne.s32.totalorder %s141, %s142
      %p156 = scmp.eq.s32.totalorder %s24, 1
      %p157 = por %p155, %p156
      %p159 = scmp.ne.s32.totalorder %s142, %s158
      %p160 = scmp.eq.s32.totalorder %s24, 0
      %p161 = por %p159, %p160
      %p162 = scmp.le.s32.totalorder 1, %s18
      %p163 = scmp.lt.s32.totalorder %s18, 3
      %p164 = pnand %p162, %p163
      %p165 = pneg %p164
      // Predicated region
      $region9: #{tpu_custom_call.1} parent=5 // pred_check
        _
      $region10: #{tpu_custom_call.1} parent=5 // pred_check_branch
        %167 = sbr.rel (%p164) target = $region12
      $region11: #{tpu_custom_call.1} parent=5 // pred_region
        %s168 = ssub.s32 %s18, 1
        // Predicated region
        $region13: #{tpu_custom_call.1} parent=11 // pred_check
          %p169 = pneg %p65
        $region14: #{tpu_custom_call.1} parent=11 // pred_check_branch
          %171 = sbr.rel (%p169) target = $region16
        $region15: #{tpu_custom_call.1} parent=11 // pred_region
          %173 = vsyncadd [#allocation6], 0
          %s175 = sshll.u32 %s1, 4
          %s176 = int_to_ptr.hbm [resolvable:$true] %s175
          %s177 = sshll.u32 [#allocation5], 4
          %s178 = int_to_ptr.vmem [resolvable:$true] %s177
          %180 = dma.hbm_to_vmem [thread:$0]  %s176, 16, %s178, [#allocation6]
        $region16: #{tpu_custom_call.1} parent=11 // pred_fallthru
          _
        // Predicated region
        $region17: #{tpu_custom_call.1} parent=11 // pred_check
          %p181 = pneg %p86
        $region18: #{tpu_custom_call.1} parent=11 // pred_check_branch
          %183 = sbr.rel (%p181) target = $region20
        $region19: #{tpu_custom_call.1} parent=11 // pred_region
          _
        $region20: #{tpu_custom_call.1} parent=11 // pred_fallthru
          _
        // Predicated region
        $region21: #{tpu_custom_call.1} parent=11 // pred_check
          %p184 = pneg %p107
        $region22: #{tpu_custom_call.1} parent=11 // pred_check_branch
          %186 = sbr.rel (%p184) target = $region24
        $region23: #{tpu_custom_call.1} parent=11 // pred_region
          %188 = vsyncadd [#allocation6], 0
          %s189 = sshll.u32 %s3, 4
          %s190 = int_to_ptr.hbm [resolvable:$true] %s189
          %s191 = sshll.u32 [#allocation7], 4
          %s192 = int_to_ptr.vmem [resolvable:$true] %s191
          %197 = dma.hbm_to_vmem [thread:$0]  %s190, 512, %s192, [#allocation6], 128, 128, 8
        $region24: #{tpu_custom_call.1} parent=11 // pred_fallthru
          _
        // Predicated region
        $region25: #{tpu_custom_call.1} parent=11 // pred_check
          %p198 = pneg %p128
        $region26: #{tpu_custom_call.1} parent=11 // pred_check_branch
          %200 = sbr.rel (%p198) target = $region28
        $region27: #{tpu_custom_call.1} parent=11 // pred_region
          _
        $region28: #{tpu_custom_call.1} parent=11 // pred_fallthru
          _
      $region12: #{tpu_custom_call.1} parent=5 // pred_fallthru
        _
      %p201 = scmp.lt.s32.totalorder %s18, 2
      // Predicated region
      $region29: #{tpu_custom_call.1} parent=5 // pred_check
        %p202 = pneg %p201
      $region30: #{tpu_custom_call.1} parent=5 // pred_check_branch
        %204 = sbr.rel (%p202) target = $region32
      $region31: #{tpu_custom_call.1} parent=5 // pred_region
        // Predicated region
        $region33: #{tpu_custom_call.1} parent=31 // pred_check
          %p205 = pneg %p38
        $region34: #{tpu_custom_call.1} parent=31 // pred_check_branch
          %207 = sbr.rel (%p205) target = $region36
        $region35: #{tpu_custom_call.1} parent=31 // pred_region
          %s208 = sand.u32 %s28, 1
          %s209 = scalar_lea.sflag [#allocation3], %s208
          %s210 = sand.u32 %s28, 1
          %s211 = smul.addr %s210, 8
          %s212 = scalar_lea.vmem [#allocation2], %s211
          %214 = vsyncadd %s209, 0
          %s215 = smul.addr %s18, 8
          %s216 = scalar_lea.hbm %s0, %s215
          %s218 = sshll.u32 %s216, 4
          %s219 = int_to_ptr.hbm [resolvable:$true] %s218
          %s220 = sshll.u32 %s212, 4
          %s221 = int_to_ptr.vmem [resolvable:$true] %s220
          %223 = dma.hbm_to_vmem [thread:$0]  %s219, 128, %s221, %s209
        $region36: #{tpu_custom_call.1} parent=31 // pred_fallthru
          _
      $region32: #{tpu_custom_call.1} parent=5 // pred_fallthru
        _
      %p224 = scmp.le.s32.totalorder 1, %s18
      %p225 = scmp.lt.s32.totalorder %s18, 3
      %p226 = pnand %p224, %p225
      %p227 = pneg %p226
      // Predicated region
      $region37: #{tpu_custom_call.1} parent=5 // pred_check
        _
      $region38: #{tpu_custom_call.1} parent=5 // pred_check_branch
        %229 = sbr.rel (%p226) target = $region40
      $region39: #{tpu_custom_call.1} parent=5 // pred_region
        %s230 = ssub.s32 %s18, 1
        %s231 = sand.u32 %s31, 1
        %s232 = scalar_lea.sflag [#allocation3], %s231
        %s233 = sand.u32 %s31, 1
        %s234 = smul.addr %s233, 8
        %s235 = scalar_lea.vmem [#allocation2], %s234
        // Predicated region
        $region41: #{tpu_custom_call.1} parent=39 // pred_check
          %p236 = pneg %p44
        $region42: #{tpu_custom_call.1} parent=39 // pred_check_branch
          %238 = sbr.rel (%p236) target = $region44
        $region43: #{tpu_custom_call.1} parent=39 // pred_region
          %240 = dma.done %s232, 128
        $region44: #{tpu_custom_call.1} parent=39 // pred_fallthru
          _
        // Predicated region
        $region45: #{tpu_custom_call.1} parent=39 // pred_check
          %p241 = pneg %p65
        $region46: #{tpu_custom_call.1} parent=39 // pred_check_branch
          %243 = sbr.rel (%p241) target = $region48
        $region47: #{tpu_custom_call.1} parent=39 // pred_region
          %245 = dma.done [#allocation6], 16
        $region48: #{tpu_custom_call.1} parent=39 // pred_fallthru
          _
        // Predicated region
        $region49: #{tpu_custom_call.1} parent=39 // pred_check
          %p246 = pneg %p107
        $region50: #{tpu_custom_call.1} parent=39 // pred_check_branch
          %248 = sbr.rel (%p246) target = $region52
        $region51: #{tpu_custom_call.1} parent=39 // pred_region
          %250 = dma.done [#allocation6], 512
        $region52: #{tpu_custom_call.1} parent=39 // pred_fallthru
          _
        %s251 = sand.u32 %s31, 1
        %s252 = scalar_lea.sflag [#allocation3], %s251
        %s253 = sand.u32 %s31, 1
        %s254 = smul.addr %s253, 8
        %s255 = scalar_lea.vmem [#allocation2], %s254
        %p256 = pneg %p44
        %p257 = pneg %p41
        %p258 = pneg %p65
        %p259 = pneg %p62
        %p260 = pneg %p86
        %p261 = pneg %p83
        %p262 = pneg %p107
        %p263 = pneg %p104
        %p264 = pneg %p128
        %p265 = pneg %p125
        %p266 = pneg %p154
        %p267 = pneg %p151
        %s268 = sand.u32 %s141, 1
        %s269 = scalar_lea.sflag [#allocation4], %s268
        %s270 = sand.u32 %s141, 1
        %s271 = smul.addr %s270, 8
        %s272 = scalar_lea.vmem [#allocation8], %s271
        %v273 = vld [vmem:[%s235] sm:$0xff]
        %vm274 = vcmask 261120
        %v275 = vsel %vm274, %v273, 0.0
        %276 = vadd.xlane.f32.xlu0 %v275
        %v277 = vpop.xlane.xlu0 %276
        %v278 = vmul.f32 %v273, %v273
        %v279 = vsel %vm274, %v278, 0.0
        %280 = vadd.xlane.f32.xlu0 %v279
        %v281 = vpop.xlane.xlu0 %280
        %v282 = vmul.f32 %v277, 0.03125
        %v283 = vmul.f32 %v281, 0.03125
        %v284 = vmul.f32 %v282, %v282
        %v285 = vsub.f32 %v283, %v284
        %v286 = vmax.f32 %v285, 0.0
        %v287 = vsub.f32 %v273, %v282
        %v288 = vadd.f32 %v286, 1e-05
        %v289 = vrsqrt.pop %v288
        %v290 = vmul.f32 %v289, %v288
        %v291 = vmul.f32 %v290, %v289
        %v292 = vmul.f32 0.5, %v291
        %v293 = vsub.f32 1.5, %v292
        %v294 = vmul.f32 %v289, %v293
        %vm295 = vweird.f32 %v288
        %vm296 = vweird.f32 %v289
        %vm297 = vmor %vm295, %vm296
        %v298 = vsel %vm297, %v289, %v294
        %v299 = vmul.f32 %v287, %v298
        %v300 = vld [vmem:[#allocation5] sm:$0x1]
        %v302 = vperm.slane %v300, 0
        %v304 = vmul.f32 %v299, %v302
        %v305 = vld [vmem:[%s2] sm:$0x1]
        %v307 = vperm.slane %v305, 0
        %v309 = vadd.f32 %v304, %v307
        %v310 = vld [vmem:[#allocation7] sm:$0xff]
        %v311 = vld [vmem:[#allocation7 + $0x8] sm:$0xff]
        %v312 = vld [vmem:[#allocation7 + $0x10] sm:$0xff]
        %v313 = vld [vmem:[#allocation7 + $0x18] sm:$0xff]
        %v314 = vld [vmem:[%s4] sm:$0x1]
        %v316 = vperm.slane %v314, 0
        %v319 = vsel %vm274, %v309, 0
        %321 = vmatpush.msra.mxu0 0.0
        %322 = vmatpush.msra.mxu0 0.0
        %323 = vmatpush.msra.mxu0 0.0
        %324 = vmatpush.msra.mxu0 0.0
        %325 = vmatpush.msra.mxu0 0.0
        %326 = vmatpush.msra.mxu0 0.0
        %327 = vmatpush.msra.mxu0 0.0
        %328 = vmatpush.msra.mxu0 0.0
        %329 = vmatpush.msra.mxu0 0.0
        %330 = vmatpush.msra.mxu0 0.0
        %331 = vmatpush.msra.mxu0 0.0
        %332 = vmatpush.msra.mxu0 0.0
        %333 = vmatpush.msra.mxu0 %v313
        %334 = vmatpush.msra.mxu0 %v312
        %335 = vmatpush.msra.mxu0 %v311
        %336 = vmatpush.msra.mxu0 %v310
        %337 = vmatmul.f32.gmra.mxu0 %v319
        %v338 = vpop.f32.mrf.mxu0
        %v339 = vadd.f32 %v316, %v338
        %340 = vdwg.mxu0
        %341 = vst.msk [vmem:[%s272] sm:$0xff] %vm274, %v339
        %s342 = sand.u32 %s141, 1
        %s343 = scalar_lea.sflag [#allocation4], %s342
        %s344 = sand.u32 %s141, 1
        %s345 = smul.addr %s344, 8
        %s346 = scalar_lea.vmem [#allocation8], %s345
        // Predicated region
        $region53: #{tpu_custom_call.1} parent=39 // pred_check
          %p347 = pneg %p151
        $region54: #{tpu_custom_call.1} parent=39 // pred_check_branch
          %349 = sbr.rel (%p347) target = $region56
        $region55: #{tpu_custom_call.1} parent=39 // pred_region
          %351 = vsyncadd %s343, 0
          %s352 = smul.addr %s23, 8
          %s353 = scalar_lea.hbm %s5, %s352
          %s355 = sshll.u32 %s346, 4
          %s356 = int_to_ptr.vmem [resolvable:$true] %s355
          %s357 = sshll.u32 %s353, 4
          %s358 = int_to_ptr.hbm [resolvable:$true] %s357
          %360 = dma.vmem_to_hbm [thread:$0]  %s356, 128, %s358, %s343
        $region56: #{tpu_custom_call.1} parent=39 // pred_fallthru
          _
      $region40: #{tpu_custom_call.1} parent=5 // pred_fallthru
        _
      %p361 = scmp.le.s32.totalorder 2, %s18
      // Predicated region
      $region57: #{tpu_custom_call.1} parent=5 // pred_check
        %p362 = pneg %p361
      $region58: #{tpu_custom_call.1} parent=5 // pred_check_branch
        %364 = sbr.rel (%p362) target = $region60
      $region59: #{tpu_custom_call.1} parent=5 // pred_region
        %s365 = ssub.s32 %s18, 2
        // Predicated region
        $region61: #{tpu_custom_call.1} parent=59 // pred_check
          %p366 = pneg %p157
        $region62: #{tpu_custom_call.1} parent=59 // pred_check_branch
          %368 = sbr.rel (%p366) target = $region64
        $region63: #{tpu_custom_call.1} parent=59 // pred_region
          %s369 = sand.u32 %s142, 1
          %s370 = scalar_lea.sflag [#allocation4], %s369
          %s371 = sand.u32 %s142, 1
          %s372 = smul.addr %s371, 8
          %s373 = scalar_lea.vmem [#allocation8], %s372
          %375 = dma.done %s370, 128
        $region64: #{tpu_custom_call.1} parent=59 // pred_fallthru
          _
      $region60: #{tpu_custom_call.1} parent=5 // pred_fallthru
        _
    $region6: #{tpu_custom_call.1} parent=1 // loop_footer
      %s22 = sadd.s32 1, %s18
    $region7: #{tpu_custom_call.1} parent=1 // loop_footer_branch
      %17 = sbr.rel target = $region3
    $region8: #{tpu_custom_call.1} parent=1 // loop_exit
      _
    %376 = vsyncpa [#allocation3], 1
    %s377 = scalar_lea.sflag [#allocation3], 1
    %378 = vsyncpa %s377, 1
    %379 = vsyncpa [#allocation6], 1
    %380 = vsyncpa [#allocation4], 1
    %s381 = scalar_lea.sflag [#allocation4], 1
    %382 = vsyncpa %s381, 1

// kernel: tpu_custom_call.1
$region0: #{tpu_custom_call.1}
  #allocation0 [shape = 'u32[]', space=smem, size = 0x4, offset = 0x4, fixed_abs, tag = 'smem constant byte address 0x4 - core index']
  #allocation1 [shape = 'u32[72,128]{1,0:T(1,128)}', space=vmem, size = 0x9000, scoped, tag = 'internal scratch']
  %s0 = inlined_call_operand.hbm [shape: f32[16,32], index: 0, kind: input, shape index: {}]
  %s1 = inlined_call_operand.hbm [shape: f32[1,32], index: 1, kind: input, shape index: {}]
  %s2 = inlined_call_operand.vmem [shape: f32[1,32], index: 2, kind: input, shape index: {}]
  %s3 = inlined_call_operand.hbm [shape: f32[32,32], index: 3, kind: input, shape index: {}]
  %s4 = inlined_call_operand.vmem [shape: f32[1,32], index: 4, kind: input, shape index: {}]
  %s5 = inlined_call_operand.hbm [shape: f32[16,32], index: 5, kind: output, shape index: {}]
  %s6 = sld [smem:[#allocation0]]
  $region65: #{tpu_custom_call.1} parent=0
    _
  %s8 = ssub.s32 1, %s6
  %s9 = scalar_select 0, %s8, %s6
  $region1: #{tpu_custom_call.1} parent=0
    #allocation2 [shape = 'u8[8192]{0}', space=vmem, size = 0x2000, scoped, tag = 'input window, operand 0']
    #allocation3 [shape = 's32[2]{0}', space=sflag, size = 0x8, scoped, tag = 'scoped memory for tpu_custom_call.1']
    #allocation4 [shape = 's32[2]{0}', space=sflag, size = 0x8, scoped, tag = 'scoped memory for tpu_custom_call.1']
    #allocation5 [shape = 'u8[512]{0}', space=vmem, size = 0x400, scoped, tag = 'input window, operand 1, single buffered']
    #allocation6 [shape = 's32[1]{0}', space=sflag, size = 0x4, scoped, tag = 'scoped memory for tpu_custom_call.1']
    #allocation7 [shape = 'u8[16384]{0}', space=vmem, size = 0x4000, scoped, tag = 'input window, operand 3, single buffered']
    #allocation8 [shape = 'u8[8192]{0}', space=vmem, size = 0x2000, scoped, tag = 'output window, operand 0']
    %10 = vsyncpa [#allocation3], 0
    %s11 = scalar_lea.sflag [#allocation3], 1
    %12 = vsyncpa %s11, 0
    %13 = vsyncpa [#allocation6], 0
    %14 = vsyncpa [#allocation4], 0
    %s15 = scalar_lea.sflag [#allocation4], 1
    %16 = vsyncpa %s15, 0
    loop: start=0, step=1, limit=4
    $region2: #{tpu_custom_call.1} parent=1 // loop_pre_header
      _
    $region3: #{tpu_custom_call.1} parent=1 // loop_header
      %s18 = sphi 0, %s22
      %p19 = scmp.ge.s32.totalorder %s18, 4
      %s28 = sphi 0, %s30
      %s31 = sphi 0, %s28
      %s32 = sphi 0, %s31
      %s48 = sphi 0, %s32
      %s52 = sphi 0, %s52
      %s54 = sphi 0, %s52
      %s55 = sphi 0, %s54
      %s69 = sphi 0, %s55
      %s73 = sphi 0, %s73
      %s75 = sphi 0, %s73
      %s76 = sphi 0, %s75
      %s90 = sphi 0, %s76
      %s94 = sphi 0, %s94
      %s96 = sphi 0, %s94
      %s97 = sphi 0, %s96
      %s111 = sphi 0, %s97
      %s115 = sphi 0, %s115
      %s117 = sphi 0, %s115
      %s118 = sphi 0, %s117
      %s132 = sphi 0, %s118
      %s138 = sphi 0, %s140
      %s141 = sphi 0, %s138
      %s142 = sphi 0, %s141
      %s158 = sphi 0, %s142
    $region4: #{tpu_custom_call.1} parent=1 // loop_header_branch
      %21 = sbr.rel (%p19) target = $region8
    $region5: #{tpu_custom_call.1} parent=1 // loop_body
      %s23 = ssub.s32 %s18, 1
      %s24 = ssub.s32 %s18, 2
      %s25 = sadd.s32 %s18, 1
      %s26 = ssub.s32 %s18, %s25
      %p27 = scmp.eq.s32.totalorder %s26, 0
      %s29 = sadd.s32 %s28, 1
      %s30 = scalar_select %p27, %s28, %s29
      %p33 = pneg %p27
      %p34 = scmp.eq.s32.totalorder %s18, 1
      %p35 = por %p33, %p34
      %p36 = scmp.ne.s32.totalorder %s28, %s31
      %p37 = scmp.eq.s32.totalorder %s18, 0
      %p38 = por %p36, %p37
      %p39 = scmp.ne.s32.totalorder %s28, %s31
      %p40 = scmp.eq.s32.totalorder %s23, 1
      %p41 = por %p39, %p40
      %p42 = scmp.ne.s32.totalorder %s31, %s32
      %p43 = scmp.eq.s32.totalorder %s23, 0
      %p44 = por %p42, %p43
      %p45 = scmp.ne.s32.totalorder %s31, %s32
      %p46 = scmp.eq.s32.totalorder %s24, 1
      %p47 = por %p45, %p46
      %p49 = scmp.ne.s32.totalorder %s32, %s48
      %p50 = scmp.eq.s32.totalorder %s24, 0
      %p51 = por %p49, %p50
      %s53 = sadd.s32 %s52, 1
      %p56 = scmp.eq.s32.totalorder %s18, 1
      %p57 = scmp.ne.s32.totalorder %s52, %s54
      %p58 = scmp.eq.s32.totalorder %s18, 0
      %p59 = por %p57, %p58
      %p60 = scmp.ne.s32.totalorder %s52, %s54
      %p61 = scmp.eq.s32.totalorder %s23, 1
      %p62 = por %p60, %p61
      %p63 = scmp.ne.s32.totalorder %s54, %s55
      %p64 = scmp.eq.s32.totalorder %s23, 0
      %p65 = por %p63, %p64
      %p66 = scmp.ne.s32.totalorder %s54, %s55
      %p67 = scmp.eq.s32.totalorder %s24, 1
      %p68 = por %p66, %p67
      %p70 = scmp.ne.s32.totalorder %s55, %s69
      %p71 = scmp.eq.s32.totalorder %s24, 0
      %p72 = por %p70, %p71
      %s74 = sadd.s32 %s73, 1
      %p77 = scmp.eq.s32.totalorder %s18, 1
      %p78 = scmp.ne.s32.totalorder %s73, %s75
      %p79 = scmp.eq.s32.totalorder %s18, 0
      %p80 = por %p78, %p79
      %p81 = scmp.ne.s32.totalorder %s73, %s75
      %p82 = scmp.eq.s32.totalorder %s23, 1
      %p83 = por %p81, %p82
      %p84 = scmp.ne.s32.totalorder %s75, %s76
      %p85 = scmp.eq.s32.totalorder %s23, 0
      %p86 = por %p84, %p85
      %p87 = scmp.ne.s32.totalorder %s75, %s76
      %p88 = scmp.eq.s32.totalorder %s24, 1
      %p89 = por %p87, %p88
      %p91 = scmp.ne.s32.totalorder %s76, %s90
      %p92 = scmp.eq.s32.totalorder %s24, 0
      %p93 = por %p91, %p92
      %s95 = sadd.s32 %s94, 1
      %p98 = scmp.eq.s32.totalorder %s18, 1
      %p99 = scmp.ne.s32.totalorder %s94, %s96
      %p100 = scmp.eq.s32.totalorder %s18, 0
      %p101 = por %p99, %p100
      %p102 = scmp.ne.s32.totalorder %s94, %s96
      %p103 = scmp.eq.s32.totalorder %s23, 1
      %p104 = por %p102, %p103
      %p105 = scmp.ne.s32.totalorder %s96, %s97
      %p106 = scmp.eq.s32.totalorder %s23, 0
      %p107 = por %p105, %p106
      %p108 = scmp.ne.s32.totalorder %s96, %s97
      %p109 = scmp.eq.s32.totalorder %s24, 1
      %p110 = por %p108, %p109
      %p112 = scmp.ne.s32.totalorder %s97, %s111
      %p113 = scmp.eq.s32.totalorder %s24, 0
      %p114 = por %p112, %p113
      %s116 = sadd.s32 %s115, 1
      %p119 = scmp.eq.s32.totalorder %s18, 1
      %p120 = scmp.ne.s32.totalorder %s115, %s117
      %p121 = scmp.eq.s32.totalorder %s18, 0
      %p122 = por %p120, %p121
      %p123 = scmp.ne.s32.totalorder %s115, %s117
      %p124 = scmp.eq.s32.totalorder %s23, 1
      %p125 = por %p123, %p124
      %p126 = scmp.ne.s32.totalorder %s117, %s118
      %p127 = scmp.eq.s32.totalorder %s23, 0
      %p128 = por %p126, %p127
      %p129 = scmp.ne.s32.totalorder %s117, %s118
      %p130 = scmp.eq.s32.totalorder %s24, 1
      %p131 = por %p129, %p130
      %p133 = scmp.ne.s32.totalorder %s118, %s132
      %p134 = scmp.eq.s32.totalorder %s24, 0
      %p135 = por %p133, %p134
      %s136 = ssub.s32 %s18, %s25
      %p137 = scmp.eq.s32.totalorder %s136, 0
      %s139 = sadd.s32 %s138, 1
      %s140 = scalar_select %p137, %s138, %s139
      %p143 = pneg %p137
      %p144 = scmp.eq.s32.totalorder %s18, 1
      %p145 = por %p143, %p144
      %p146 = scmp.ne.s32.totalorder %s138, %s141
      %p147 = scmp.eq.s32.totalorder %s18, 0
      %p148 = por %p146, %p147
      %p149 = scmp.ne.s32.totalorder %s138, %s141
      %p150 = scmp.eq.s32.totalorder %s23, 1
      %p151 = por %p149, %p150
      %p152 = scmp.ne.s32.totalorder %s141, %s142
      %p153 = scmp.eq.s32.totalorder %s23, 0
      %p154 = por %p152, %p153
      %p155 = scmp.ne.s32.totalorder %s141, %s142
      %p156 = scmp.eq.s32.totalorder %s24, 1
      %p157 = por %p155, %p156
      %p159 = scmp.ne.s32.totalorder %s142, %s158
      %p160 = scmp.eq.s32.totalorder %s24, 0
      %p161 = por %p159, %p160
      %p162 = scmp.le.s32.totalorder 1, %s18
      %p163 = scmp.lt.s32.totalorder %s18, 3
      %p164 = pnand %p162, %p163
      %p165 = pneg %p164
      // Predicated region
      $region9: #{tpu_custom_call.1} parent=5 // pred_check
        _
      $region10: #{tpu_custom_call.1} parent=5 // pred_check_branch
        %167 = sbr.rel (%p164) target = $region12
      $region11: #{tpu_custom_call.1} parent=5 // pred_region
        %s168 = ssub.s32 %s18, 1
        // Predicated region
        $region13: #{tpu_custom_call.1} parent=11 // pred_check
          %p169 = pneg %p65
        $region14: #{tpu_custom_call.1} parent=11 // pred_check_branch
          %171 = sbr.rel (%p169) target = $region16
        $region15: #{tpu_custom_call.1} parent=11 // pred_region
          %173 = vsyncadd [#allocation6], 0
          %s175 = sshll.u32 %s1, 4
          %s176 = int_to_ptr.hbm [resolvable:$true] %s175
          %s177 = sshll.u32 [#allocation5], 4
          %s178 = int_to_ptr.vmem [resolvable:$true] %s177
          %180 = dma.hbm_to_vmem [thread:$0]  %s176, 16, %s178, [#allocation6]
        $region16: #{tpu_custom_call.1} parent=11 // pred_fallthru
          _
        // Predicated region
        $region17: #{tpu_custom_call.1} parent=11 // pred_check
          %p181 = pneg %p86
        $region18: #{tpu_custom_call.1} parent=11 // pred_check_branch
          %183 = sbr.rel (%p181) target = $region20
        $region19: #{tpu_custom_call.1} parent=11 // pred_region
          _
        $region20: #{tpu_custom_call.1} parent=11 // pred_fallthru
          _
        // Predicated region
        $region21: #{tpu_custom_call.1} parent=11 // pred_check
          %p184 = pneg %p107
        $region22: #{tpu_custom_call.1} parent=11 // pred_check_branch
          %186 = sbr.rel (%p184) target = $region24
        $region23: #{tpu_custom_call.1} parent=11 // pred_region
          %188 = vsyncadd [#allocation6], 0
          %s189 = sshll.u32 %s3, 4
          %s190 = int_to_ptr.hbm [resolvable:$true] %s189
          %s191 = sshll.u32 [#allocation7], 4
          %s192 = int_to_ptr.vmem [resolvable:$true] %s191
          %197 = dma.hbm_to_vmem [thread:$0]  %s190, 512, %s192, [#allocation6], 128, 128, 8
        $region24: #{tpu_custom_call.1} parent=11 // pred_fallthru
          _
        // Predicated region
        $region25: #{tpu_custom_call.1} parent=11 // pred_check
          %p198 = pneg %p128
        $region26: #{tpu_custom_call.1} parent=11 // pred_check_branch
          %200 = sbr.rel (%p198) target = $region28
        $region27: #{tpu_custom_call.1} parent=11 // pred_region
          _
        $region28: #{tpu_custom_call.1} parent=11 // pred_fallthru
          _
      $region12: #{tpu_custom_call.1} parent=5 // pred_fallthru
        _
      %p201 = scmp.lt.s32.totalorder %s18, 2
      // Predicated region
      $region29: #{tpu_custom_call.1} parent=5 // pred_check
        %p202 = pneg %p201
      $region30: #{tpu_custom_call.1} parent=5 // pred_check_branch
        %204 = sbr.rel (%p202) target = $region32
      $region31: #{tpu_custom_call.1} parent=5 // pred_region
        // Predicated region
        $region33: #{tpu_custom_call.1} parent=31 // pred_check
          %p205 = pneg %p38
        $region34: #{tpu_custom_call.1} parent=31 // pred_check_branch
          %207 = sbr.rel (%p205) target = $region36
        $region35: #{tpu_custom_call.1} parent=31 // pred_region
          %s208 = sand.u32 %s28, 1
          %s209 = scalar_lea.sflag [#allocation3], %s208
          %s210 = sand.u32 %s28, 1
          %s211 = smul.addr %s210, 8
          %s212 = scalar_lea.vmem [#allocation2], %s211
          %214 = vsyncadd %s209, 0
          %s215 = smul.addr %s18, 8
          %s216 = scalar_lea.hbm %s0, %s215
          %s218 = sshll.u32 %s216, 4
          %s219 = int_to_ptr.hbm [resolvable:$true] %s218
          %s220 = sshll.u32 %s212, 4
          %s221 = int_to_ptr.vmem [resolvable:$true] %s220
          %223 = dma.hbm_to_vmem [thread:$0]  %s219, 128, %s221, %s209
        $region36: #{tpu_custom_call.1} parent=31 // pred_fallthru
          _
      $region32: #{tpu_custom_call.1} parent=5 // pred_fallthru
        _
      %p224 = scmp.le.s32.totalorder 1, %s18
      %p225 = scmp.lt.s32.totalorder %s18, 3
      %p226 = pnand %p224, %p225
      %p227 = pneg %p226
      // Predicated region
      $region37: #{tpu_custom_call.1} parent=5 // pred_check
        _
      $region38: #{tpu_custom_call.1} parent=5 // pred_check_branch
        %229 = sbr.rel (%p226) target = $region40
      $region39: #{tpu_custom_call.1} parent=5 // pred_region
        %s230 = ssub.s32 %s18, 1
        %s231 = sand.u32 %s31, 1
        %s232 = scalar_lea.sflag [#allocation3], %s231
        %s233 = sand.u32 %s31, 1
        %s234 = smul.addr %s233, 8
        %s235 = scalar_lea.vmem [#allocation2], %s234
        // Predicated region
        $region41: #{tpu_custom_call.1} parent=39 // pred_check
          %p236 = pneg %p44
        $region42: #{tpu_custom_call.1} parent=39 // pred_check_branch
          %238 = sbr.rel (%p236) target = $region44
        $region43: #{tpu_custom_call.1} parent=39 // pred_region
          %240 = dma.done %s232, 128
        $region44: #{tpu_custom_call.1} parent=39 // pred_fallthru
          _
        // Predicated region
        $region45: #{tpu_custom_call.1} parent=39 // pred_check
          %p241 = pneg %p65
        $region46: #{tpu_custom_call.1} parent=39 // pred_check_branch
          %243 = sbr.rel (%p241) target = $region48
        $region47: #{tpu_custom_call.1} parent=39 // pred_region
          %245 = dma.done [#allocation6], 16
        $region48: #{tpu_custom_call.1} parent=39 // pred_fallthru
          _
        // Predicated region
        $region49: #{tpu_custom_call.1} parent=39 // pred_check
          %p246 = pneg %p107
        $region50: #{tpu_custom_call.1} parent=39 // pred_check_branch
          %248 = sbr.rel (%p246) target = $region52
        $region51: #{tpu_custom_call.1} parent=39 // pred_region
          %250 = dma.done [#allocation6], 512
        $region52: #{tpu_custom_call.1} parent=39 // pred_fallthru
          _
        %s251 = sand.u32 %s31, 1
        %s252 = scalar_lea.sflag [#allocation3], %s251
        %s253 = sand.u32 %s31, 1
        %s254 = smul.addr %s253, 8
        %s255 = scalar_lea.vmem [#allocation2], %s254
        %p256 = pneg %p44
        %p257 = pneg %p41
        %p258 = pneg %p65
        %p259 = pneg %p62
        %p260 = pneg %p86
        %p261 = pneg %p83
        %p262 = pneg %p107
        %p263 = pneg %p104
        %p264 = pneg %p128
        %p265 = pneg %p125
        %p266 = pneg %p154
        %p267 = pneg %p151
        %s268 = sand.u32 %s141, 1
        %s269 = scalar_lea.sflag [#allocation4], %s268
        %s270 = sand.u32 %s141, 1
        %s271 = smul.addr %s270, 8
        %s272 = scalar_lea.vmem [#allocation8], %s271
        %v273 = vld [vmem:[%s235] sm:$0xff]
        %vm274 = vcmask 261120
        %v275 = vsel %vm274, %v273, 0.0
        %276 = vadd.xlane.f32.xlu0 %v275
        %v277 = vpop.xlane.xlu0 %276
        %v278 = vmul.f32 %v273, %v273
        %v279 = vsel %vm274, %v278, 0.0
        %280 = vadd.xlane.f32.xlu0 %v279
        %v281 = vpop.xlane.xlu0 %280
        %v282 = vmul.f32 %v277, 0.03125
        %v283 = vmul.f32 %v281, 0.03125
        %v284 = vmul.f32 %v282, %v282
        %v285 = vsub.f32 %v283, %v284
        %v286 = vmax.f32 %v285, 0.0
        %v287 = vsub.f32 %v273, %v282
        %v288 = vadd.f32 %v286, 1e-05
        %v289 = vrsqrt.pop %v288
        %v290 = vmul.f32 %v289, %v288
        %v291 = vmul.f32 %v290, %v289
        %v292 = vmul.f32 0.5, %v291
        %v293 = vsub.f32 1.5, %v292
        %v294 = vmul.f32 %v289, %v293
        %vm295 = vweird.f32 %v288
        %vm296 = vweird.f32 %v289
        %vm297 = vmor %vm295, %vm296
        %v298 = vsel %vm297, %v289, %v294
        %v299 = vmul.f32 %v287, %v298
        %v300 = vld [vmem:[#allocation5] sm:$0x1]
        %v302 = vperm.slane %v300, 0
        %v304 = vmul.f32 %v299, %v302
        %v305 = vld [vmem:[%s2] sm:$0x1]
        %v307 = vperm.slane %v305, 0
        %v309 = vadd.f32 %v304, %v307
        %v310 = vld [vmem:[#allocation7] sm:$0xff]
        %v311 = vld [vmem:[#allocation7 + $0x8] sm:$0xff]
        %v312 = vld [vmem:[#allocation7 + $0x10] sm:$0xff]
        %v313 = vld [vmem:[#allocation7 + $0x18] sm:$0xff]
        %v314 = vld [vmem:[%s4] sm:$0x1]
        %v316 = vperm.slane %v314, 0
        %v319 = vsel %vm274, %v309, 0
        %321 = vmatpush.msra.mxu0 0.0
        %322 = vmatpush.msra.mxu0 0.0
        %323 = vmatpush.msra.mxu0 0.0
        %324 = vmatpush.msra.mxu0 0.0
        %325 = vmatpush.msra.mxu0 0.0
        %326 = vmatpush.msra.mxu0 0.0
        %327 = vmatpush.msra.mxu0 0.0
        %328 = vmatpush.msra.mxu0 0.0
        %329 = vmatpush.msra.mxu0 0.0
        %330 = vmatpush.msra.mxu0 0.0
        %331 = vmatpush.msra.mxu0 0.0
        %332 = vmatpush.msra.mxu0 0.0
        %333 = vmatpush.msra.mxu0 %v313
        %334 = vmatpush.msra.mxu0 %v312
        %335 = vmatpush.msra.mxu0 %v311
        %336 = vmatpush.msra.mxu0 %v310
        %337 = vmatmul.f32.gmra.mxu0 %v319
        %v338 = vpop.f32.mrf.mxu0
        %v339 = vadd.f32 %v316, %v338
        %340 = vdwg.mxu0
        %341 = vst.msk [vmem:[%s272] sm:$0xff] %vm274, %v339
        %s342 = sand.u32 %s141, 1
        %s343 = scalar_lea.sflag [#allocation4], %s342
        %s344 = sand.u32 %s141, 1
        %s345 = smul.addr %s344, 8
        %s346 = scalar_lea.vmem [#allocation8], %s345
        // Predicated region
        $region53: #{tpu_custom_call.1} parent=39 // pred_check
          %p347 = pneg %p151
        $region54: #{tpu_custom_call.1} parent=39 // pred_check_branch
          %349 = sbr.rel (%p347) target = $region56
        $region55: #{tpu_custom_call.1} parent=39 // pred_region
          %351 = vsyncadd %s343, 0
          %s352 = smul.addr %s23, 8
          %s353 = scalar_lea.hbm %s5, %s352
          %s355 = sshll.u32 %s346, 4
          %s356 = int_to_ptr.vmem [resolvable:$true] %s355
          %s357 = sshll.u32 %s353, 4
          %s358 = int_to_ptr.hbm [resolvable:$true] %s357
          %360 = dma.vmem_to_hbm [thread:$0]  %s356, 128, %s358, %s343
        $region56: #{tpu_custom_call.1} parent=39 // pred_fallthru
          _
      $region40: #{tpu_custom_call.1} parent=5 // pred_fallthru
        _
      %p361 = scmp.le.s32.totalorder 2, %s18
      // Predicated region
      $region57: #{tpu_custom_call.1} parent=5 // pred_check
        %p362 = pneg %p361
      $region58: #{tpu_custom_call.1} parent=5 // pred_check_branch
        %364 = sbr.rel (%p362) target = $region60
      $region59: #{tpu_custom_call.1} parent=5 // pred_region
        %s365 = ssub.s32 %s18, 2
        // Predicated region
        $region61: #{tpu_custom_call.1} parent=59 // pred_check
          %p366 = pneg %p157
        $region62: #{tpu_custom_call.1} parent=59 // pred_check_branch
          %368 = sbr.rel (%p366) target = $region64
        $region63: #{tpu_custom_call.1} parent=59 // pred_region
          %s369 = sand.u32 %s142, 1
          %s370 = scalar_lea.sflag [#allocation4], %s369
          %s371 = sand.u32 %s142, 1
          %s372 = smul.addr %s371, 8
          %s373 = scalar_lea.vmem [#allocation8], %s372
          %375 = dma.done %s370, 128
        $region64: #{tpu_custom_call.1} parent=59 // pred_fallthru
          _
      $region60: #{tpu_custom_call.1} parent=5 // pred_fallthru
        _
    $region6: #{tpu_custom_call.1} parent=1 // loop_footer
      %s22 = sadd.s32 1, %s18
    $region7: #{tpu_custom_call.1} parent=1 // loop_footer_branch
      %17 = sbr.rel target = $region3
    $region8: #{tpu_custom_call.1} parent=1 // loop_exit
      _
    %376 = vsyncpa [#allocation3], 1
    %s377 = scalar_lea.sflag [#allocation3], 1
    %378 = vsyncpa %s377, 1
    %379 = vsyncpa [#allocation6], 1
    %380 = vsyncpa [#allocation4], 1
    %s381 = scalar_lea.sflag [#allocation4], 1
    %382 = vsyncpa %s381, 1

</llo_original>
